<compile_context>
chip_gen: v6e
topology: v6e:2x2x1
jax: 0.10.0
libtpu: 0.0.40
codegen_flags: <defaults>
</compile_context>

<pallas_src>
import jax
import jax.numpy as jnp
from jax.experimental import pallas as pl
from jax.experimental.pallas import tpu as pltpu

HIDDEN1 = 64
HIDDEN2 = 32


def _mlp_kernel(x_ref, w1_ref, b1_ref, w2_ref, b2_ref, w3_ref, b3_ref, o_ref):
    # x tile arrives as f32; cast to bf16 inside the kernel (VPU slot has slack,
    # and it avoids a separate un-hidden XLA cast pass over x in HBM).
    xb = x_ref[...].astype(w1_ref.dtype)                          # (tb, F) bf16
    # layer_1 + ReLU:  (64, F) contracted with (tb, F) over F -> (64, tb)
    h1 = jax.lax.dot_general(w1_ref[...], xb,
                             dimension_numbers=(((1,), (1,)), ((), ())),
                             preferred_element_type=jnp.float32)
    h1 = jnp.maximum(h1 + b1_ref[...], 0.0).astype(w2_ref.dtype)  # (64, tb) bf16
    # layer_2 + ReLU:  (32, 64) @ (64, tb) -> (32, tb)
    h2 = jnp.dot(w2_ref[...], h1, preferred_element_type=jnp.float32)
    h2 = jnp.maximum(h2 + b2_ref[...], 0.0).astype(w3_ref.dtype)  # (32, tb) bf16
    # output_layer (logits, no activation):  (C, 32) @ (32, tb) -> (C, tb)
    out = jnp.dot(w3_ref[...], h2, preferred_element_type=jnp.float32)
    o_ref[...] = (out + b3_ref[...]).astype(o_ref.dtype)


def _round_up(n, m):
    return -(-n // m) * m


def _vmem_limit_bytes(tile_b, in_features, num_classes):
    lane = lambda n: _round_up(max(n, 1), 128)    # lane (last) dim pads to 128
    sub8 = lambda n: _round_up(max(n, 1), 8)      # f32: 8 sublanes / vreg
    sub16 = lambda n: _round_up(max(n, 1), 16)    # bf16 packs 16 sublanes / vreg

    # Streamed tiles (double-buffered by the pipeline): f32 x (tb, F), f32 logits (C, tb).
    streamed = 2 * (sub8(tile_b) * lane(in_features) * 4
                    + sub8(num_classes) * lane(tile_b) * 4)
    # Resident, single-buffered bf16 weights + f32 (out,1) biases.
    weights = ((sub16(HIDDEN1) * lane(in_features)
                + sub16(HIDDEN2) * lane(HIDDEN1)
                + sub16(num_classes) * lane(HIDDEN2)) * 2
               + (sub8(HIDDEN1) + sub8(HIDDEN2) + sub8(num_classes)) * lane(1) * 4)
    # In-kernel values: bf16 x cast, h1/h2 (f32 accum + bf16 recast), f32 logits accum.
    interm = (sub16(tile_b) * lane(in_features) * 2
              + (sub8(HIDDEN1) + sub8(HIDDEN2)) * lane(tile_b) * 4
              + (sub16(HIDDEN1) + sub16(HIDDEN2)) * lane(tile_b) * 2
              + sub8(num_classes) * lane(tile_b) * 4)
    total = streamed + weights + interm + (4 << 20)   # + compiler headroom
    # Cap well below v7x's 64 MiB physical VMEM per TensorCore.
    return min(_round_up(total, 1 << 20), 48 << 20)


def prepare_params(params, compute_dtype=jnp.bfloat16):
    """One-time glue (NOT per forward call): keep PyTorch (out,in) weight layout
    (no transpose needed for the batch-in-lanes formulation), cast to the MXU
    compute dtype; biases stay f32 as (out,1) columns so they broadcast over the
    batch lanes inside the kernel."""
    return {
        "w1": jnp.asarray(params["w1"]).astype(compute_dtype),   # (64, F)
        "w2": jnp.asarray(params["w2"]).astype(compute_dtype),   # (32, 64)
        "w3": jnp.asarray(params["w3"]).astype(compute_dtype),   # (C, 32)
        "b1": jnp.asarray(params["b1"], jnp.float32)[:, None],   # (64, 1)
        "b2": jnp.asarray(params["b2"], jnp.float32)[:, None],   # (32, 1)
        "b3": jnp.asarray(params["b3"], jnp.float32)[:, None],   # (C, 1)
    }


def drug_classifier_forward(x, prepped, *, tile_b=4096):
    """x: (B, input_features) f32. prepped: output of prepare_params().
    Returns (B, num_classes) f32 logits."""
    B, F = x.shape
    C = prepped["w3"].shape[0]

    # Batch tile: big tiles amortize the ~0.35 us/step grid overhead.
    if B <= tile_b:
        tb = B                                       # single step, block == full array
    else:
        tb = max(256, (min(int(tile_b), B) // 256) * 256)   # lane-dense multiple of 256
        steps = -(-B // tb)
        if steps > 1 and steps % 2 == 1:
            # v7x: keep the "parallel" batch axis even across its 2 TensorCores
            # (no-op on single-TC v5e/v6e).
            tb_even = max(256, _round_up(-(-B // (steps + 1)), 256))
            if (-(-B // tb_even)) % 2 == 0:
                tb = tb_even
    grid = (pl.cdiv(B, tb),)

    # Constant index_map -> weights/biases stay resident; single-buffer them.
    resident = lambda shape: pl.BlockSpec(shape, lambda i: (0, 0),
                                          pipeline_mode=pl.Buffered(1))

    out_cb = pl.pallas_call(
        _mlp_kernel,
        out_shape=jax.ShapeDtypeStruct((C, B), jnp.float32),
        grid=grid,
        in_specs=[
            pl.BlockSpec((tb, F), lambda i: (i, 0)),            # streamed f32 x tile
            resident((HIDDEN1, F)), resident((HIDDEN1, 1)),     # layer_1 (resident)
            resident((HIDDEN2, HIDDEN1)), resident((HIDDEN2, 1)),   # layer_2
            resident((C, HIDDEN2)), resident((C, 1)),           # output_layer
        ],
        out_specs=pl.BlockSpec((C, tb), lambda i: (0, i)),      # lane-dense logits tile
        compiler_params=pltpu.CompilerParams(
            dimension_semantics=("parallel",),                  # megacore on v7x
            vmem_limit_bytes=_vmem_limit_bytes(tb, F, C),
        ),
    )(x, prepped["w1"], prepped["b1"], prepped["w2"], prepped["b2"],
      prepped["w3"], prepped["b3"])
    # One tiny (C, B) -> (B, C) transpose outside the kernel to match nn.Module.
    return out_cb.T


def init_params(key, input_features, num_classes):
    """Deterministic init mimicking PyTorch nn.Linear default
    (U[-1/sqrt(fan_in), 1/sqrt(fan_in)]); stored in PyTorch (out,in) convention."""
    def linear(k, fan_in, fan_out):
        kw, kb = jax.random.split(k)
        bound = 1.0 / jnp.sqrt(fan_in)
        w = jax.random.uniform(kw, (fan_out, fan_in), jnp.float32, -bound, bound)
        b = jax.random.uniform(kb, (fan_out,), jnp.float32, -bound, bound)
        return w, b

    k1, k2, k3 = jax.random.split(key, 3)
    w1, b1 = linear(k1, input_features, HIDDEN1)
    w2, b2 = linear(k2, HIDDEN1, HIDDEN2)
    w3, b3 = linear(k3, HIDDEN2, num_classes)
    return {"w1": w1, "b1": b1, "w2": w2, "b2": b2, "w3": w3, "b3": b3}


def _reference_forward(x, p, compute_dtype=jnp.bfloat16):
    """Pure-JAX reference emulating the kernel's bf16-in / f32-accumulate math."""
    xb = x.astype(compute_dtype)
    w1 = p["w1"].astype(compute_dtype)
    w2 = p["w2"].astype(compute_dtype)
    w3 = p["w3"].astype(compute_dtype)
    h1 = jnp.maximum(jnp.dot(xb, w1.T, preferred_element_type=jnp.float32)
                     + p["b1"][None, :], 0.0)
    h2 = jnp.maximum(jnp.dot(h1.astype(compute_dtype), w2.T,
                             preferred_element_type=jnp.float32)
                     + p["b2"][None, :], 0.0)
    return (jnp.dot(h2.astype(compute_dtype), w3.T,
                    preferred_element_type=jnp.float32) + p["b3"][None, :])


if __name__ == "__main__":
    key = jax.random.PRNGKey(0)
    k_params, k_x1, k_x2 = jax.random.split(key, 3)

    input_features = 16
    num_classes = 5

    params = init_params(k_params, input_features, num_classes)
    prepped = prepare_params(params)  # one-time: bf16 cast, (out,1) biases

    # Small single-tile case (matches the module's toy usage).
    x_small = jax.random.normal(k_x1, (8, input_features), jnp.float32)
    out_small = jax.block_until_ready(drug_classifier_forward(x_small, prepped))
    ref_small = _reference_forward(x_small, params)
    assert out_small.shape == (8, num_classes)
    assert jnp.allclose(out_small, ref_small, atol=1e-2, rtol=1e-2), "small-batch mismatch"

    # Multi-tile case: exercises the batch grid, resident single-buffered
    # weights, lane-dense output blocks, AND a ragged last tile (1000 % 256 != 0).
    x_big = jax.random.normal(k_x2, (1000, input_features), jnp.float32)
    out_big = jax.block_until_ready(drug_classifier_forward(x_big, prepped, tile_b=256))
    ref_big = _reference_forward(x_big, params)
    assert out_big.shape == (1000, num_classes)
    assert jnp.allclose(out_big, ref_big, atol=1e-2, rtol=1e-2), "multi-tile mismatch"

    print("KERNEL_OK")
</pallas_src>

<mosaic_0001>
module attributes {stable_mosaic.version = 11 : i64} {
  func.func @_mlp_kernel(%arg0: i32, %arg1: memref<8x16xf32, #tpu.memory_space<vmem>>, %arg2: memref<64x16xbf16, #tpu.memory_space<vmem>>, %arg3: memref<64x1xf32, #tpu.memory_space<vmem>>, %arg4: memref<32x64xbf16, #tpu.memory_space<vmem>>, %arg5: memref<32x1xf32, #tpu.memory_space<vmem>>, %arg6: memref<5x32xbf16, #tpu.memory_space<vmem>>, %arg7: memref<5x1xf32, #tpu.memory_space<vmem>>, %arg8: memref<5x8xf32, #tpu.memory_space<vmem>>) attributes {dimension_semantics = [#tpu.dimension_semantics<parallel>], iteration_bounds = array<i64: 1>, scalar_prefetch = 0 : i64, scratch_operands = 0 : i64, tpu.core_type = #tpu.core_type<tc>, window_params = [{transform_indices = @transform_0, window_bounds = array<i64: 8, 16>}, {pipeline_mode = #tpu.pipeline_mode<synchronous>, transform_indices = @transform_1, window_bounds = array<i64: 64, 16>}, {pipeline_mode = #tpu.pipeline_mode<synchronous>, transform_indices = @transform_2, window_bounds = array<i64: 64, 1>}, {pipeline_mode = #tpu.pipeline_mode<synchronous>, transform_indices = @transform_3, window_bounds = array<i64: 32, 64>}, {pipeline_mode = #tpu.pipeline_mode<synchronous>, transform_indices = @transform_4, window_bounds = array<i64: 32, 1>}, {pipeline_mode = #tpu.pipeline_mode<synchronous>, transform_indices = @transform_5, window_bounds = array<i64: 5, 32>}, {pipeline_mode = #tpu.pipeline_mode<synchronous>, transform_indices = @transform_6, window_bounds = array<i64: 5, 1>}, {transform_indices = @transform_7, window_bounds = array<i64: 5, 8>}]} {
    %c0 = arith.constant 0 : index
    %c0_0 = arith.constant 0 : index
    %0 = vector.load %arg1[%c0, %c0_0] : memref<8x16xf32, #tpu.memory_space<vmem>>, vector<8x16xf32>
    %1 = arith.truncf %0 : vector<8x16xf32> to vector<8x16xbf16>
    %c0_1 = arith.constant 0 : index
    %c0_2 = arith.constant 0 : index
    %2 = vector.load %arg2[%c0_1, %c0_2] : memref<64x16xbf16, #tpu.memory_space<vmem>>, vector<64x16xbf16>
    %cst = arith.constant dense<0.000000e+00> : vector<64x8xf32>
    %3 = tpu.matmul %2, %1, %cst {dimension_numbers = #tpu.dot_dimension_numbers<[1], [1], [0], [0], [0, 0, 1, 0], [], []>} : vector<64x16xbf16>, vector<8x16xbf16>, vector<64x8xf32> -> vector<64x8xf32>
    %c0_3 = arith.constant 0 : index
    %c0_4 = arith.constant 0 : index
    %4 = vector.load %arg3[%c0_3, %c0_4] : memref<64x1xf32, #tpu.memory_space<vmem>>, vector<64x1xf32>
    %5 = vector.broadcast %4 : vector<64x1xf32> to vector<64x8xf32>
    %6 = arith.addf %3, %5 : vector<64x8xf32>
    %cst_5 = arith.constant 0.000000e+00 : f32
    %7 = vector.broadcast %cst_5 : f32 to vector<64x8xf32>
    %8 = arith.maximumf %6, %7 : vector<64x8xf32>
    %9 = arith.truncf %8 : vector<64x8xf32> to vector<64x8xbf16>
    %c0_6 = arith.constant 0 : index
    %c0_7 = arith.constant 0 : index
    %10 = vector.load %arg4[%c0_6, %c0_7] : memref<32x64xbf16, #tpu.memory_space<vmem>>, vector<32x64xbf16>
    %cst_8 = arith.constant dense<0.000000e+00> : vector<32x8xf32>
    %11 = tpu.matmul %10, %9, %cst_8 {dimension_numbers = #tpu.dot_dimension_numbers<[1], [0], [0], [1], [0, 0, 1, 1], [], []>} : vector<32x64xbf16>, vector<64x8xbf16>, vector<32x8xf32> -> vector<32x8xf32>
    %c0_9 = arith.constant 0 : index
    %c0_10 = arith.constant 0 : index
    %12 = vector.load %arg5[%c0_9, %c0_10] : memref<32x1xf32, #tpu.memory_space<vmem>>, vector<32x1xf32>
    %13 = vector.broadcast %12 : vector<32x1xf32> to vector<32x8xf32>
    %14 = arith.addf %11, %13 : vector<32x8xf32>
    %cst_11 = arith.constant 0.000000e+00 : f32
    %15 = vector.broadcast %cst_11 : f32 to vector<32x8xf32>
    %16 = arith.maximumf %14, %15 : vector<32x8xf32>
    %17 = arith.truncf %16 : vector<32x8xf32> to vector<32x8xbf16>
    %c0_12 = arith.constant 0 : index
    %c0_13 = arith.constant 0 : index
    %18 = vector.load %arg6[%c0_12, %c0_13] : memref<5x32xbf16, #tpu.memory_space<vmem>>, vector<5x32xbf16>
    %cst_14 = arith.constant dense<0.000000e+00> : vector<5x8xf32>
    %19 = tpu.matmul %18, %17, %cst_14 {dimension_numbers = #tpu.dot_dimension_numbers<[1], [0], [0], [1], [0, 0, 1, 1], [], []>} : vector<5x32xbf16>, vector<32x8xbf16>, vector<5x8xf32> -> vector<5x8xf32>
    %c0_15 = arith.constant 0 : index
    %c0_16 = arith.constant 0 : index
    %20 = vector.load %arg7[%c0_15, %c0_16] : memref<5x1xf32, #tpu.memory_space<vmem>>, vector<5x1xf32>
    %21 = vector.broadcast %20 : vector<5x1xf32> to vector<5x8xf32>
    %22 = arith.addf %19, %21 : vector<5x8xf32>
    %c0_17 = arith.constant 0 : index
    %c0_18 = arith.constant 0 : index
    %23 = vector.load %arg8[%c0_17, %c0_18] : memref<5x8xf32, #tpu.memory_space<vmem>>, vector<5x8xf32>
    tpu.vector_store %arg8[%c0_17, %c0_18], %22 {strides = array<i32>} : memref<5x8xf32, #tpu.memory_space<vmem>>, vector<5x8xf32>,
    return
  }
  func.func @transform_0(%arg0: i32) -> (i32, i32) {
    %c0_i32 = arith.constant 0 : i32
    %c0_i32_0 = arith.constant 0 : i32
    return %arg0, %c0_i32 : i32, i32
  }
  func.func @transform_1(%arg0: i32) -> (i32, i32) {
    %c0_i32 = arith.constant 0 : i32
    %c0_i32_0 = arith.constant 0 : i32
    %c0_i32_1 = arith.constant 0 : i32
    return %c0_i32, %c0_i32_0 : i32, i32
  }
  func.func @transform_2(%arg0: i32) -> (i32, i32) {
    %c0_i32 = arith.constant 0 : i32
    %c0_i32_0 = arith.constant 0 : i32
    %c0_i32_1 = arith.constant 0 : i32
    return %c0_i32, %c0_i32_0 : i32, i32
  }
  func.func @transform_3(%arg0: i32) -> (i32, i32) {
    %c0_i32 = arith.constant 0 : i32
    %c0_i32_0 = arith.constant 0 : i32
    %c0_i32_1 = arith.constant 0 : i32
    return %c0_i32, %c0_i32_0 : i32, i32
  }
  func.func @transform_4(%arg0: i32) -> (i32, i32) {
    %c0_i32 = arith.constant 0 : i32
    %c0_i32_0 = arith.constant 0 : i32
    %c0_i32_1 = arith.constant 0 : i32
    return %c0_i32, %c0_i32_0 : i32, i32
  }
  func.func @transform_5(%arg0: i32) -> (i32, i32) {
    %c0_i32 = arith.constant 0 : i32
    %c0_i32_0 = arith.constant 0 : i32
    %c0_i32_1 = arith.constant 0 : i32
    return %c0_i32, %c0_i32_0 : i32, i32
  }
  func.func @transform_6(%arg0: i32) -> (i32, i32) {
    %c0_i32 = arith.constant 0 : i32
    %c0_i32_0 = arith.constant 0 : i32
    %c0_i32_1 = arith.constant 0 : i32
    return %c0_i32, %c0_i32_0 : i32, i32
  }
  func.func @transform_7(%arg0: i32) -> (i32, i32) {
    %c0_i32 = arith.constant 0 : i32
    %c0_i32_0 = arith.constant 0 : i32
    return %c0_i32, %arg0 : i32, i32
  }
}

</mosaic_0001>

<llo_original>
// kernel: tpu_custom_call.1
$region0: #{tpu_custom_call.1}
  #allocation0 [shape = 'u32[]', space=smem, size = 0x4, offset = 0x4, fixed_abs, tag = 'smem constant byte address 0x4 - core index']
  #allocation1 [shape = 'u32[144,128]{1,0:T(1,128)}', space=vmem, size = 0x12000, scoped, tag = 'internal scratch']
  %s0 = inlined_call_operand.vmem [shape: f32[8,16], index: 0, kind: input, shape index: {}]
  %s1 = inlined_call_operand.vmem [shape: bf16[64,16], index: 1, kind: input, shape index: {}]
  %s2 = inlined_call_operand.vmem [shape: f32[64,1], index: 2, kind: input, shape index: {}]
  %s3 = inlined_call_operand.vmem [shape: bf16[32,64], index: 3, kind: input, shape index: {}]
  %s4 = inlined_call_operand.vmem [shape: f32[32,1], index: 4, kind: input, shape index: {}]
  %s5 = inlined_call_operand.vmem [shape: bf16[5,32], index: 5, kind: input, shape index: {}]
  %s6 = inlined_call_operand.vmem [shape: f32[5,1], index: 6, kind: input, shape index: {}]
  %s7 = inlined_call_operand.hbm [shape: f32[5,8], index: 7, kind: output, shape index: {}]
  %s8 = sld [smem:[#allocation0]]
  $region38: #{tpu_custom_call.1} parent=0
    _
  %s10 = ssub.s32 1, %s8
  %s11 = scalar_select 0, %s10, %s8
  $region1: #{tpu_custom_call.1} parent=0
    #allocation2 [shape = 'u8[4096]{0}', space=vmem, size = 0x1000, scoped, tag = 'output window, operand 0, single buffered']
    #allocation3 [shape = 's32[1]{0}', space=sflag, size = 0x4, scoped, tag = 'scoped memory for tpu_custom_call.1']
    %12 = vsyncpa [#allocation3], 0
    // Predicated region
    $region2: #{tpu_custom_call.1} parent=1 // pred_check
      _
    $region3: #{tpu_custom_call.1} parent=1 // pred_check_branch
      %14 = sbr.rel (0) target = $region5
    $region4: #{tpu_custom_call.1} parent=1 // pred_region
      _
    $region5: #{tpu_custom_call.1} parent=1 // pred_fallthru
      _
    // Predicated region
    $region6: #{tpu_custom_call.1} parent=1 // pred_check
      _
    $region7: #{tpu_custom_call.1} parent=1 // pred_check_branch
      %16 = sbr.rel (0) target = $region9
    $region8: #{tpu_custom_call.1} parent=1 // pred_region
      _
    $region9: #{tpu_custom_call.1} parent=1 // pred_fallthru
      _
    // Predicated region
    $region10: #{tpu_custom_call.1} parent=1 // pred_check
      _
    $region11: #{tpu_custom_call.1} parent=1 // pred_check_branch
      %18 = sbr.rel (0) target = $region13
    $region12: #{tpu_custom_call.1} parent=1 // pred_region
      _
    $region13: #{tpu_custom_call.1} parent=1 // pred_fallthru
      _
    // Predicated region
    $region14: #{tpu_custom_call.1} parent=1 // pred_check
      _
    $region15: #{tpu_custom_call.1} parent=1 // pred_check_branch
      %20 = sbr.rel (0) target = $region17
    $region16: #{tpu_custom_call.1} parent=1 // pred_region
      _
    $region17: #{tpu_custom_call.1} parent=1 // pred_fallthru
      _
    // Predicated region
    $region18: #{tpu_custom_call.1} parent=1 // pred_check
      _
    $region19: #{tpu_custom_call.1} parent=1 // pred_check_branch
      %22 = sbr.rel (0) target = $region21
    $region20: #{tpu_custom_call.1} parent=1 // pred_region
      _
    $region21: #{tpu_custom_call.1} parent=1 // pred_fallthru
      _
    // Predicated region
    $region22: #{tpu_custom_call.1} parent=1 // pred_check
      _
    $region23: #{tpu_custom_call.1} parent=1 // pred_check_branch
      %24 = sbr.rel (0) target = $region25
    $region24: #{tpu_custom_call.1} parent=1 // pred_region
      _
    $region25: #{tpu_custom_call.1} parent=1 // pred_fallthru
      _
    // Predicated region
    $region26: #{tpu_custom_call.1} parent=1 // pred_check
      _
    $region27: #{tpu_custom_call.1} parent=1 // pred_check_branch
      %26 = sbr.rel (0) target = $region29
    $region28: #{tpu_custom_call.1} parent=1 // pred_region
      _
    $region29: #{tpu_custom_call.1} parent=1 // pred_fallthru
      _
    %v28 = vld [vmem:[%s0] sm:$0xff]
    %v29 = vpack.c.bf16 %v28, %v28
    %v30 = vld [vmem:[%s1] sm:$0xf]
    %v31 = vld [vmem:[%s1 + $0x4] sm:$0xf]
    %v32 = vld [vmem:[%s1 + $0x8] sm:$0xf]
    %v33 = vld [vmem:[%s1 + $0xc] sm:$0xf]
    %v34 = vld [vmem:[%s1 + $0x10] sm:$0xf]
    %v35 = vld [vmem:[%s1 + $0x14] sm:$0xf]
    %v36 = vld [vmem:[%s1 + $0x18] sm:$0xf]
    %v37 = vld [vmem:[%s1 + $0x1c] sm:$0xf]
    %v38 = vld [vmem:[%s2] sm:$0xff]
    %v39 = vld [vmem:[%s2 + $0x8] sm:$0xff]
    %v40 = vld [vmem:[%s2 + $0x10] sm:$0xff]
    %v41 = vld [vmem:[%s2 + $0x18] sm:$0xff]
    %v42 = vld [vmem:[%s2 + $0x20] sm:$0xff]
    %v43 = vld [vmem:[%s2 + $0x28] sm:$0xff]
    %v44 = vld [vmem:[%s2 + $0x30] sm:$0xff]
    %v45 = vld [vmem:[%s2 + $0x38] sm:$0xff]
    %47 = vset.pattern.permute.xlu0 0
    %48 = vperm.xlu0 %47, %v38
    %v49 = vpop.permute.xlu0 %48
    %52 = vset.pattern.permute.xlu0 0
    %53 = vperm.xlu0 %52, %v39
    %v54 = vpop.permute.xlu0 %53
    %57 = vset.pattern.permute.xlu0 0
    %58 = vperm.xlu0 %57, %v40
    %v59 = vpop.permute.xlu0 %58
    %62 = vset.pattern.permute.xlu0 0
    %63 = vperm.xlu0 %62, %v41
    %v64 = vpop.permute.xlu0 %63
    %67 = vset.pattern.permute.xlu0 0
    %68 = vperm.xlu0 %67, %v42
    %v69 = vpop.permute.xlu0 %68
    %72 = vset.pattern.permute.xlu0 0
    %73 = vperm.xlu0 %72, %v43
    %v74 = vpop.permute.xlu0 %73
    %77 = vset.pattern.permute.xlu0 0
    %78 = vperm.xlu0 %77, %v44
    %v79 = vpop.permute.xlu0 %78
    %82 = vset.pattern.permute.xlu0 0
    %83 = vperm.xlu0 %82, %v45
    %v84 = vpop.permute.xlu0 %83
    %v94 = vunpack.c.l.b16 %v30
    %v95 = vunpack.c.l.b16 %v31
    %v96 = vunpack.c.l.b16 %v32
    %v97 = vunpack.c.l.b16 %v33
    %v98 = vunpack.c.l.b16 %v34
    %v99 = vunpack.c.l.b16 %v35
    %v100 = vunpack.c.l.b16 %v36
    %v101 = vunpack.c.l.b16 %v37
    %v102 = vpack.c.b16 %v95, %v94
    %v103 = vpack.c.b16 %v97, %v96
    %v104 = vpack.c.b16 %v99, %v98
    %v105 = vpack.c.b16 %v101, %v100
    %vm106 = vcmask 130048
    %v108 = vsel %vm106, %v102, 0
    %v111 = vsel %vm106, %v103, 0
    %v114 = vsel %vm106, %v104, 0
    %v117 = vsel %vm106, %v105, 0
    %v120 = vsel %vm106, %v29, 0
    %122 = vmatprep.subr.bf16.mxu0 0
    %123 = vmatpush1.bf16.xpose.msra.mxu0 0
    %124 = vmatprep.subr.bf16.mxu0 0
    %125 = vmatpush1.bf16.xpose.msra.mxu0 0
    %126 = vmatprep.subr.bf16.mxu0 0
    %127 = vmatpush1.bf16.xpose.msra.mxu0 0
    %128 = vmatprep.subr.bf16.mxu0 0
    %129 = vmatpush1.bf16.xpose.msra.mxu0 0
    %130 = vmatprep.subr.bf16.mxu0 0
    %131 = vmatpush1.bf16.xpose.msra.mxu0 0
    %132 = vmatprep.subr.bf16.mxu0 0
    %133 = vmatpush1.bf16.xpose.msra.mxu0 0
    %134 = vmatprep.subr.bf16.mxu0 0
    %135 = vmatpush1.bf16.xpose.msra.mxu0 0
    %136 = vmatprep.subr.bf16.mxu0 0
    %137 = vmatpush1.bf16.xpose.msra.mxu0 %v120
    %138 = vmatprep.subr.bf16.mxu0 0
    %139 = vmatpush2.bf16.xpose.msra.mxu0 0
    %140 = vmatprep.subr.bf16.mxu0 0
    %141 = vmatpush2.bf16.xpose.msra.mxu0 0
    %142 = vmatprep.subr.bf16.mxu0 0
    %143 = vmatpush2.bf16.xpose.msra.mxu0 0
    %144 = vmatprep.subr.bf16.mxu0 0
    %145 = vmatpush2.bf16.xpose.msra.mxu0 0
    %146 = vmatprep.subr.bf16.mxu0 0
    %147 = vmatpush2.bf16.xpose.msra.mxu0 0
    %148 = vmatprep.subr.bf16.mxu0 0
    %149 = vmatpush2.bf16.xpose.msra.mxu0 0
    %150 = vmatprep.subr.bf16.mxu0 0
    %151 = vmatpush2.bf16.xpose.msra.mxu0 0
    %152 = vmatprep.subr.bf16.mxu0 0
    %153 = vmatpush2.bf16.xpose.msra.mxu0 0
    %154 = vmatprep.mubr.bf16.mxu0 0
    %155 = vmatmul.mubr.bf16.gmra.mxu0 %v108
    %v156 = vpop.f32.mrf.mxu0
    %v157 = vadd.f32 %v49, %v156
    %v158 = vpop.f32.mrf.mxu0
    %v159 = vpop.f32.mrf.mxu0
    %v160 = vadd.f32 %v54, %v159
    %v161 = vpop.f32.mrf.mxu0
    %162 = vmatprep.mubr.bf16.mxu0 0
    %163 = vmatmul.mubr.bf16.gmra.mxu0 %v111
    %v164 = vpop.f32.mrf.mxu0
    %v165 = vadd.f32 %v59, %v164
    %v166 = vpop.f32.mrf.mxu0
    %v167 = vpop.f32.mrf.mxu0
    %v168 = vadd.f32 %v64, %v167
    %v169 = vpop.f32.mrf.mxu0
    %170 = vmatprep.mubr.bf16.mxu0 0
    %171 = vmatmul.mubr.bf16.gmra.mxu0 %v114
    %v172 = vpop.f32.mrf.mxu0
    %v173 = vadd.f32 %v69, %v172
    %v174 = vpop.f32.mrf.mxu0
    %v175 = vpop.f32.mrf.mxu0
    %v176 = vadd.f32 %v74, %v175
    %v177 = vpop.f32.mrf.mxu0
    %178 = vmatprep.mubr.bf16.mxu0 0
    %179 = vmatmul.mubr.bf16.gmra.mxu0 %v117
    %v180 = vpop.f32.mrf.mxu0
    %v181 = vadd.f32 %v79, %v180
    %v182 = vpop.f32.mrf.mxu0
    %v183 = vpop.f32.mrf.mxu0
    %v184 = vadd.f32 %v84, %v183
    %v185 = vpop.f32.mrf.mxu0
    %186 = vdwg.mxu0
    %v187 = vmax.f32 %v157, 0.0
    %v188 = vmax.f32 %v160, 0.0
    %v189 = vmax.f32 %v165, 0.0
    %v190 = vmax.f32 %v168, 0.0
    %v191 = vmax.f32 %v173, 0.0
    %v192 = vmax.f32 %v176, 0.0
    %v193 = vmax.f32 %v181, 0.0
    %v194 = vmax.f32 %v184, 0.0
    %v195 = vpack.c.bf16 %v188, %v187
    %v196 = vpack.c.bf16 %v190, %v189
    %v197 = vpack.c.bf16 %v192, %v191
    %v198 = vpack.c.bf16 %v194, %v193
    %v199 = vld [vmem:[%s3] sm:$0xf]
    %v200 = vld [vmem:[%s3 + $0x4] sm:$0xf]
    %v201 = vld [vmem:[%s3 + $0x8] sm:$0xf]
    %v202 = vld [vmem:[%s3 + $0xc] sm:$0xf]
    %v203 = vld [vmem:[%s4] sm:$0xff]
    %v204 = vld [vmem:[%s4 + $0x8] sm:$0xff]
    %v205 = vld [vmem:[%s4 + $0x10] sm:$0xff]
    %v206 = vld [vmem:[%s4 + $0x18] sm:$0xff]
    %208 = vset.pattern.permute.xlu0 0
    %209 = vperm.xlu0 %208, %v203
    %v210 = vpop.permute.xlu0 %209
    %213 = vset.pattern.permute.xlu0 0
    %214 = vperm.xlu0 %213, %v204
    %v215 = vpop.permute.xlu0 %214
    %218 = vset.pattern.permute.xlu0 0
    %219 = vperm.xlu0 %218, %v205
    %v220 = vpop.permute.xlu0 %219
    %223 = vset.pattern.permute.xlu0 0
    %224 = vperm.xlu0 %223, %v206
    %v225 = vpop.permute.xlu0 %224
    %v231 = vunpack.c.l.b16 %v199
    %v232 = vunpack.c.l.b16 %v200
    %v233 = vunpack.c.l.b16 %v201
    %v234 = vunpack.c.l.b16 %v202
    %v235 = vpack.c.b16 %v232, %v231
    %v236 = vpack.c.b16 %v234, %v233
    %vm237 = vcmask 523264
    %v239 = vsel %vm237, %v235, 0
    %v242 = vsel %vm237, %v236, 0
    %244 = vmatprep.subr.bf16.mxu0 0
    %245 = vmatpush1.bf16.msra.mxu0 0
    %246 = vmatprep.subr.bf16.mxu0 0
    %247 = vmatpush1.bf16.msra.mxu0 0
    %248 = vmatprep.subr.bf16.mxu0 0
    %249 = vmatpush1.bf16.msra.mxu0 0
    %250 = vmatprep.subr.bf16.mxu0 0
    %251 = vmatpush1.bf16.msra.mxu0 0
    %252 = vmatprep.subr.bf16.mxu0 0
    %253 = vmatpush1.bf16.msra.mxu0 %v198
    %254 = vmatprep.subr.bf16.mxu0 0
    %255 = vmatpush1.bf16.msra.mxu0 %v197
    %256 = vmatprep.subr.bf16.mxu0 0
    %257 = vmatpush1.bf16.msra.mxu0 %v196
    %258 = vmatprep.subr.bf16.mxu0 0
    %259 = vmatpush1.bf16.msra.mxu0 %v195
    %260 = vmatprep.subr.bf16.mxu0 0
    %261 = vmatpush2.bf16.msra.mxu0 0
    %262 = vmatprep.subr.bf16.mxu0 0
    %263 = vmatpush2.bf16.msra.mxu0 0
    %264 = vmatprep.subr.bf16.mxu0 0
    %265 = vmatpush2.bf16.msra.mxu0 0
    %266 = vmatprep.subr.bf16.mxu0 0
    %267 = vmatpush2.bf16.msra.mxu0 0
    %268 = vmatprep.subr.bf16.mxu0 0
    %269 = vmatpush2.bf16.msra.mxu0 0
    %270 = vmatprep.subr.bf16.mxu0 0
    %271 = vmatpush2.bf16.msra.mxu0 0
    %272 = vmatprep.subr.bf16.mxu0 0
    %273 = vmatpush2.bf16.msra.mxu0 0
    %274 = vmatprep.subr.bf16.mxu0 0
    %275 = vmatpush2.bf16.msra.mxu0 0
    %276 = vmatprep.mubr.bf16.mxu0 0
    %277 = vmatmul.mubr.bf16.gmra.mxu0 %v239
    %v278 = vpop.f32.mrf.mxu0
    %v279 = vadd.f32 %v210, %v278
    %v280 = vpop.f32.mrf.mxu0
    %v281 = vpop.f32.mrf.mxu0
    %v282 = vadd.f32 %v215, %v281
    %v283 = vpop.f32.mrf.mxu0
    %284 = vmatprep.mubr.bf16.mxu0 0
    %285 = vmatmul.mubr.bf16.gmra.mxu0 %v242
    %v286 = vpop.f32.mrf.mxu0
    %v287 = vadd.f32 %v220, %v286
    %v288 = vpop.f32.mrf.mxu0
    %v289 = vpop.f32.mrf.mxu0
    %v290 = vadd.f32 %v225, %v289
    %v291 = vpop.f32.mrf.mxu0
    %292 = vdwg.mxu0
    %v293 = vmax.f32 %v279, 0.0
    %v294 = vmax.f32 %v282, 0.0
    %v295 = vmax.f32 %v287, 0.0
    %v296 = vmax.f32 %v290, 0.0
    %v297 = vpack.c.bf16 %v294, %v293
    %v298 = vpack.c.bf16 %v296, %v295
    %v299 = vld [vmem:[%s5] sm:$0x7]
    %v300 = vld [vmem:[%s6] sm:$0x1f]
    %302 = vset.pattern.permute.xlu0 0
    %303 = vperm.xlu0 %302, %v300
    %v304 = vpop.permute.xlu0 %303
    %vm306 = vcmask 261120
    %v308 = vsel %vm306, %v299, 0
    %310 = vmatprep.subr.bf16.mxu0 0
    %311 = vmatpush1.bf16.msra.mxu0 0
    %312 = vmatprep.subr.bf16.mxu0 0
    %313 = vmatpush1.bf16.msra.mxu0 0
    %314 = vmatprep.subr.bf16.mxu0 0
    %315 = vmatpush1.bf16.msra.mxu0 0
    %316 = vmatprep.subr.bf16.mxu0 0
    %317 = vmatpush1.bf16.msra.mxu0 0
    %318 = vmatprep.subr.bf16.mxu0 0
    %319 = vmatpush1.bf16.msra.mxu0 0
    %320 = vmatprep.subr.bf16.mxu0 0
    %321 = vmatpush1.bf16.msra.mxu0 0
    %322 = vmatprep.subr.bf16.mxu0 0
    %323 = vmatpush1.bf16.msra.mxu0 %v298
    %324 = vmatprep.subr.bf16.mxu0 0
    %325 = vmatpush1.bf16.msra.mxu0 %v297
    %326 = vmatprep.subr.bf16.mxu0 0
    %327 = vmatpush2.bf16.msra.mxu0 0
    %328 = vmatprep.subr.bf16.mxu0 0
    %329 = vmatpush2.bf16.msra.mxu0 0
    %330 = vmatprep.subr.bf16.mxu0 0
    %331 = vmatpush2.bf16.msra.mxu0 0
    %332 = vmatprep.subr.bf16.mxu0 0
    %333 = vmatpush2.bf16.msra.mxu0 0
    %334 = vmatprep.subr.bf16.mxu0 0
    %335 = vmatpush2.bf16.msra.mxu0 0
    %336 = vmatprep.subr.bf16.mxu0 0
    %337 = vmatpush2.bf16.msra.mxu0 0
    %338 = vmatprep.subr.bf16.mxu0 0
    %339 = vmatpush2.bf16.msra.mxu0 0
    %340 = vmatprep.subr.bf16.mxu0 0
    %341 = vmatpush2.bf16.msra.mxu0 0
    %342 = vmatprep.mubr.bf16.mxu0 0
    %343 = vmatmul.mubr.bf16.gmra.mxu0 %v308
    %v344 = vpop.f32.mrf.mxu0
    %v345 = vadd.f32 %v304, %v344
    %v346 = vpop.f32.mrf.mxu0
    %v347 = vpop.f32.mrf.mxu0
    %v348 = vpop.f32.mrf.mxu0
    %349 = vdwg.mxu0
    %vm350 = vcmask 61440
    %351 = vst.msk [vmem:[#allocation2] sm:$0x1f] %vm350, %v345
    // Predicated region
    $region30: #{tpu_custom_call.1} parent=1 // pred_check
      _
    $region31: #{tpu_custom_call.1} parent=1 // pred_check_branch
      %353 = sbr.rel (0) target = $region33
    $region32: #{tpu_custom_call.1} parent=1 // pred_region
      %s355 = ssub.s32 128, 128
      %356 = vsyncadd [#allocation3], %s355
      %s358 = sshll.u32 [#allocation2], 4
      %s359 = int_to_ptr.vmem [resolvable:$true] %s358
      %361 = dma.vmem_to_hbm [thread:$0]  %s359, 128, %s7, [#allocation3]
    $region33: #{tpu_custom_call.1} parent=1 // pred_fallthru
      _
    // Predicated region
    $region34: #{tpu_custom_call.1} parent=1 // pred_check
      _
    $region35: #{tpu_custom_call.1} parent=1 // pred_check_branch
      %363 = sbr.rel (0) target = $region37
    $region36: #{tpu_custom_call.1} parent=1 // pred_region
      %364 = dma.done [#allocation3], 128
    $region37: #{tpu_custom_call.1} parent=1 // pred_fallthru
      _
    %365 = vsyncpa [#allocation3], 1

</llo_original>
